<compile_context>
chip_gen: v6e
topology: v6e:2x2x1
jax: 0.10.0
libtpu: 0.0.40
codegen_flags: <defaults>
</compile_context>

<pallas_src>
import functools

import jax
import jax.numpy as jnp
from jax.experimental import pallas as pl
from jax.experimental.pallas import tpu as pltpu

GAMMA = 1.5
ALPHA = 0.25
LANES = 128
SUBLANES = 8
MAX_BLOCK_ROWS = 4096         # (4096, 128) f32 = 2 MiB per input tile
SINGLE_BLOCK_ROWS = 2048      # <= 1 MiB f32: not worth splitting for megacore


def _ceil8(n):
    return -(-n // SUBLANES) * SUBLANES


def _focal_loss_kernel(pred_ref, true_ref, partial_ref, *, gamma, alpha,
                       block_rows, grid_n, last_block_valid, needs_mask):
    n_strips = block_rows // SUBLANES

    def strip_loss(x, y):
        # Stable BCEWithLogits: max(x,0) - x*y + log1p(exp(-|x|)); the single
        # exp(-|x|) also feeds the sigmoid via an approx EUP reciprocal.
        e = jnp.exp(-jnp.abs(x))
        bce = jnp.maximum(x, 0.0) - x * y + jnp.log1p(e)
        r = pl.reciprocal(1.0 + e, approx=True)
        p = jnp.where(x >= 0, r, e * r)                  # sigmoid(x)
        one_minus_pt = p + y - 2.0 * p * y               # 1 - p_t
        alpha_factor = (1.0 - alpha) + (2.0 * alpha - 1.0) * y
        if gamma == 1.5:
            mod = one_minus_pt * jnp.sqrt(one_minus_pt)  # z**1.5 = z*sqrt(z)
        elif gamma == 2.0:
            mod = one_minus_pt * one_minus_pt
        elif gamma == 1.0:
            mod = one_minus_pt
        else:
            mod = jnp.power(one_minus_pt, gamma)         # generic fallback
        return bce * alpha_factor * mod

    def accumulate(masked):
        if masked:
            row = jax.lax.broadcasted_iota(jnp.int32, (SUBLANES, LANES), 0)
            lane = jax.lax.broadcasted_iota(jnp.int32, (SUBLANES, LANES), 1)
            strip_idx = row * LANES + lane               # hoisted out of loop

        def body(s, acc):
            r0 = pl.multiple_of(s * SUBLANES, SUBLANES)
            x = pred_ref[pl.ds(r0, SUBLANES), :].astype(jnp.float32)
            y = true_ref[pl.ds(r0, SUBLANES), :].astype(jnp.float32)
            loss = strip_loss(x, y)
            if masked:
                # Per-block index < block_rows*128 <= 524288: int32-safe.
                idx = s * (SUBLANES * LANES) + strip_idx
                loss = jnp.where(idx < last_block_valid, loss, 0.0)
            return acc + loss

        acc0 = jnp.zeros((SUBLANES, LANES), jnp.float32)
        return jax.lax.fori_loop(0, n_strips, body, acc0,
                                 unroll=min(4, n_strips))

    if not needs_mask:
        partial_ref[...] = accumulate(masked=False)
    elif grid_n == 1:
        partial_ref[...] = accumulate(masked=True)
    else:
        i = pl.program_id(0)

        @pl.when(i < grid_n - 1)        # fast, unmasked path for full blocks
        def _():
            partial_ref[...] = accumulate(masked=False)

        @pl.when(i == grid_n - 1)       # masked path only on the last block
        def _():
            partial_ref[...] = accumulate(masked=True)


def focal_loss(pred, true, gamma=GAMMA, alpha=ALPHA, reduction='mean'):
    assert pred.shape == true.shape
    total = int(pred.size)
    assert total > 0

    rows_exact, rem = divmod(total, LANES)
    if rem == 0:
        rows = rows_exact

        def to2d(a):
            return a.reshape(rows, LANES)        # free row-major reshape
    else:
        # Sub-128 tail: a rectangular 2D operand needs one host-side pad copy.
        # TODO(synk): a manual-DMA 1D path could avoid this copy entirely.
        rows = rows_exact + 1
        pad = rows * LANES - total

        def to2d(a):
            return jnp.pad(a.reshape(-1), (0, pad)).reshape(rows, LANES)

    rows8 = _ceil8(rows)
    if rows8 <= SINGLE_BLOCK_ROWS:
        block_rows = rows8
    else:
        # >= 2 roughly-equal blocks so the "parallel" axis can shard across
        # both TensorCores on v7x; each input tile capped at 2 MiB.
        n_blocks = max(2, -(-rows8 // MAX_BLOCK_ROWS))
        block_rows = _ceil8(-(-rows8 // n_blocks))
    grid_n = -(-rows // block_rows)

    covered = grid_n * block_rows * LANES
    needs_mask = covered != total
    # Valid elements in the last grid block (Python int <= block_rows*128).
    last_block_valid = total - (grid_n - 1) * block_rows * LANES

    pred2d = to2d(pred)
    true2d = to2d(true)   # bf16 inputs welcome; kernel upcasts per strip.

    kernel = functools.partial(
        _focal_loss_kernel, gamma=float(gamma), alpha=float(alpha),
        block_rows=block_rows, grid_n=grid_n,
        last_block_valid=last_block_valid, needs_mask=needs_mask)

    in_bytes = (pred2d.size * jnp.dtype(pred2d.dtype).itemsize
                + true2d.size * jnp.dtype(true2d.dtype).itemsize)
    out_bytes = grid_n * SUBLANES * LANES * 4
    cost = pl.CostEstimate(flops=20 * total, transcendentals=4 * total,
                           bytes_accessed=in_bytes + out_bytes)

    partials = pl.pallas_call(
        kernel,
        out_shape=jax.ShapeDtypeStruct((grid_n * SUBLANES, LANES), jnp.float32),
        grid_spec=pltpu.PrefetchScalarGridSpec(
            num_scalar_prefetch=0,
            grid=(grid_n,),
            in_specs=[
                pl.BlockSpec((block_rows, LANES), lambda i: (i, 0)),
                pl.BlockSpec((block_rows, LANES), lambda i: (i, 0)),
            ],
            out_specs=pl.BlockSpec((SUBLANES, LANES), lambda i: (i, 0)),
        ),
        compiler_params=pltpu.CompilerParams(
            dimension_semantics=("parallel",)),
        cost_estimate=cost,
    )(pred2d, true2d)

    # Tiny final reduce (grid_n x 4 KiB of lane-dense partials) in the wrapper;
    # keeps the grid axis "parallel" for v7x megacore.
    total_loss = jnp.sum(partials)
    if reduction == 'mean':
        return total_loss / jnp.float32(total)
    elif reduction == 'sum':
        return total_loss
    # TODO(synk): reduction='none' would need a per-element output kernel.
    raise ValueError(f"unsupported reduction: {reduction}")


def _reference(pred, true, gamma=GAMMA, alpha=ALPHA):
    x = pred.astype(jnp.float32)
    y = true.astype(jnp.float32)
    bce = jnp.maximum(x, 0.0) - x * y + jnp.log1p(jnp.exp(-jnp.abs(x)))
    p = jax.nn.sigmoid(x)
    p_t = y * p + (1 - y) * (1 - p)
    af = y * alpha + (1 - y) * (1 - alpha)
    mf = (1.0 - p_t) ** gamma
    return jnp.mean(bce * af * mf)


if __name__ == "__main__":
    key = jax.random.PRNGKey(0)
    k1, k2 = jax.random.split(key)
    # NCHW inputs, consistent with typical detection-head logits/targets.
    x = jax.random.normal(k1, (2, 4, 16, 16), dtype=jnp.float32)            # pred
    t = (jax.random.uniform(k2, (2, 4, 16, 16)) > 0.5).astype(jnp.float32)  # true

    loss = focal_loss(x, t)
    jax.block_until_ready(loss)

    ref = _reference(x, t)
    # Slightly relaxed tolerance: sigmoid uses the EUP approximate reciprocal.
    assert jnp.allclose(loss, ref, rtol=2e-3, atol=1e-4), (loss, ref)
    print("KERNEL_OK")
</pallas_src>

<mosaic_0001>
module attributes {stable_mosaic.version = 11 : i64} {
  func.func @_focal_loss_kernel(%arg0: i32, %arg1: memref<16x128xf32, #tpu.memory_space<vmem>>, %arg2: memref<16x128xf32, #tpu.memory_space<vmem>>, %arg3: memref<8x128xf32, #tpu.memory_space<vmem>>) attributes {dimension_semantics = [#tpu.dimension_semantics<parallel>], iteration_bounds = array<i64: 1>, scalar_prefetch = 0 : i64, scratch_operands = 0 : i64, tpu.core_type = #tpu.core_type<tc>, window_params = [{transform_indices = @transform_0, window_bounds = array<i64: 16, 128>}, {transform_indices = @transform_1, window_bounds = array<i64: 16, 128>}, {transform_indices = @transform_2, window_bounds = array<i64: 8, 128>}]} {
    %cst = arith.constant 0.000000e+00 : f32
    %0 = vector.broadcast %cst : f32 to vector<8x128xf32>
    %c0_i32 = arith.constant 0 : i32
    %c8_i32 = arith.constant 8 : i32
    %1 = arith.muli %c0_i32, %c8_i32 : i32
    %2 = tpu.assume_multiple %1, 8 : i32
    %3 = arith.index_cast %2 : i32 to index
    %c0 = arith.constant 0 : index
    %4 = vector.load %arg1[%3, %c0] : memref<16x128xf32, #tpu.memory_space<vmem>>, vector<8x128xf32>
    %5 = arith.index_cast %2 : i32 to index
    %c0_0 = arith.constant 0 : index
    %6 = vector.load %arg2[%5, %c0_0] : memref<16x128xf32, #tpu.memory_space<vmem>>, vector<8x128xf32>
    %7 = math.absf %4 : vector<8x128xf32>
    %cst_1 = arith.constant 0.000000e+00 : f32
    %8 = vector.broadcast %cst_1 : f32 to vector<8x128xf32>
    %9 = arith.subf %8, %7 : vector<8x128xf32>
    %10 = math.exp %9 : vector<8x128xf32>
    %cst_2 = arith.constant 0.000000e+00 : f32
    %11 = vector.broadcast %cst_2 : f32 to vector<8x128xf32>
    %12 = arith.maximumf %4, %11 : vector<8x128xf32>
    %13 = arith.mulf %4, %6 : vector<8x128xf32>
    %14 = arith.subf %12, %13 : vector<8x128xf32>
    %15 = math.log1p %10 : vector<8x128xf32>
    %16 = arith.addf %14, %15 : vector<8x128xf32>
    %cst_3 = arith.constant 1.000000e+00 : f32
    %17 = vector.broadcast %cst_3 : f32 to vector<8x128xf32>
    %18 = arith.addf %17, %10 : vector<8x128xf32>
    %19 = tpu.reciprocal %18 {approx = true} : vector<8x128xf32> -> vector<8x128xf32>
    %cst_4 = arith.constant 0.000000e+00 : f32
    %20 = vector.broadcast %cst_4 : f32 to vector<8x128xf32>
    %21 = arith.cmpf oge, %4, %20 : vector<8x128xf32>
    %22 = arith.mulf %10, %19 : vector<8x128xf32>
    %23 = arith.select %21, %19, %22 : vector<8x128xi1>, vector<8x128xf32>
    %24 = arith.addf %23, %6 : vector<8x128xf32>
    %cst_5 = arith.constant 2.000000e+00 : f32
    %25 = vector.broadcast %cst_5 : f32 to vector<8x128xf32>
    %26 = arith.mulf %25, %23 : vector<8x128xf32>
    %27 = arith.mulf %26, %6 : vector<8x128xf32>
    %28 = arith.subf %24, %27 : vector<8x128xf32>
    %cst_6 = arith.constant -5.000000e-01 : f32
    %29 = vector.broadcast %cst_6 : f32 to vector<8x128xf32>
    %30 = arith.mulf %29, %6 : vector<8x128xf32>
    %cst_7 = arith.constant 7.500000e-01 : f32
    %31 = vector.broadcast %cst_7 : f32 to vector<8x128xf32>
    %32 = arith.addf %31, %30 : vector<8x128xf32>
    %33 = math.sqrt %28 : vector<8x128xf32>
    %34 = arith.mulf %28, %33 : vector<8x128xf32>
    %35 = arith.mulf %16, %32 : vector<8x128xf32>
    %36 = arith.mulf %35, %34 : vector<8x128xf32>
    %37 = arith.addf %0, %36 : vector<8x128xf32>
    %c1_i32 = arith.constant 1 : i32
    %c8_i32_8 = arith.constant 8 : i32
    %38 = arith.muli %c1_i32, %c8_i32_8 : i32
    %39 = tpu.assume_multiple %38, 8 : i32
    %40 = arith.index_cast %39 : i32 to index
    %c0_9 = arith.constant 0 : index
    %41 = vector.load %arg1[%40, %c0_9] : memref<16x128xf32, #tpu.memory_space<vmem>>, vector<8x128xf32>
    %42 = arith.index_cast %39 : i32 to index
    %c0_10 = arith.constant 0 : index
    %43 = vector.load %arg2[%42, %c0_10] : memref<16x128xf32, #tpu.memory_space<vmem>>, vector<8x128xf32>
    %44 = math.absf %41 : vector<8x128xf32>
    %cst_11 = arith.constant 0.000000e+00 : f32
    %45 = vector.broadcast %cst_11 : f32 to vector<8x128xf32>
    %46 = arith.subf %45, %44 : vector<8x128xf32>
    %47 = math.exp %46 : vector<8x128xf32>
    %cst_12 = arith.constant 0.000000e+00 : f32
    %48 = vector.broadcast %cst_12 : f32 to vector<8x128xf32>
    %49 = arith.maximumf %41, %48 : vector<8x128xf32>
    %50 = arith.mulf %41, %43 : vector<8x128xf32>
    %51 = arith.subf %49, %50 : vector<8x128xf32>
    %52 = math.log1p %47 : vector<8x128xf32>
    %53 = arith.addf %51, %52 : vector<8x128xf32>
    %cst_13 = arith.constant 1.000000e+00 : f32
    %54 = vector.broadcast %cst_13 : f32 to vector<8x128xf32>
    %55 = arith.addf %54, %47 : vector<8x128xf32>
    %56 = tpu.reciprocal %55 {approx = true} : vector<8x128xf32> -> vector<8x128xf32>
    %cst_14 = arith.constant 0.000000e+00 : f32
    %57 = vector.broadcast %cst_14 : f32 to vector<8x128xf32>
    %58 = arith.cmpf oge, %41, %57 : vector<8x128xf32>
    %59 = arith.mulf %47, %56 : vector<8x128xf32>
    %60 = arith.select %58, %56, %59 : vector<8x128xi1>, vector<8x128xf32>
    %61 = arith.addf %60, %43 : vector<8x128xf32>
    %cst_15 = arith.constant 2.000000e+00 : f32
    %62 = vector.broadcast %cst_15 : f32 to vector<8x128xf32>
    %63 = arith.mulf %62, %60 : vector<8x128xf32>
    %64 = arith.mulf %63, %43 : vector<8x128xf32>
    %65 = arith.subf %61, %64 : vector<8x128xf32>
    %cst_16 = arith.constant -5.000000e-01 : f32
    %66 = vector.broadcast %cst_16 : f32 to vector<8x128xf32>
    %67 = arith.mulf %66, %43 : vector<8x128xf32>
    %cst_17 = arith.constant 7.500000e-01 : f32
    %68 = vector.broadcast %cst_17 : f32 to vector<8x128xf32>
    %69 = arith.addf %68, %67 : vector<8x128xf32>
    %70 = math.sqrt %65 : vector<8x128xf32>
    %71 = arith.mulf %65, %70 : vector<8x128xf32>
    %72 = arith.mulf %53, %69 : vector<8x128xf32>
    %73 = arith.mulf %72, %71 : vector<8x128xf32>
    %74 = arith.addf %37, %73 : vector<8x128xf32>
    %c2_i32 = arith.constant 2 : i32
    %c0_18 = arith.constant 0 : index
    %c0_19 = arith.constant 0 : index
    %75 = vector.load %arg3[%c0_18, %c0_19] : memref<8x128xf32, #tpu.memory_space<vmem>>, vector<8x128xf32>
    tpu.vector_store %arg3[%c0_18, %c0_19], %74 {strides = array<i32>} : memref<8x128xf32, #tpu.memory_space<vmem>>, vector<8x128xf32>,
    return
  }
  func.func @transform_0(%arg0: i32) -> (i32, i32) {
    %c0_i32 = arith.constant 0 : i32
    %c0_i32_0 = arith.constant 0 : i32
    return %arg0, %c0_i32 : i32, i32
  }
  func.func @transform_1(%arg0: i32) -> (i32, i32) {
    %c0_i32 = arith.constant 0 : i32
    %c0_i32_0 = arith.constant 0 : i32
    return %arg0, %c0_i32 : i32, i32
  }
  func.func @transform_2(%arg0: i32) -> (i32, i32) {
    %c0_i32 = arith.constant 0 : i32
    %c0_i32_0 = arith.constant 0 : i32
    return %arg0, %c0_i32 : i32, i32
  }
}

</mosaic_0001>

<llo_original>
// kernel: tpu_custom_call.1
$region0: #{tpu_custom_call.1}
  #allocation0 [shape = 'u32[]', space=smem, size = 0x4, offset = 0x4, fixed_abs, tag = 'smem constant byte address 0x4 - core index']
  #allocation1 [shape = 'u32[144,128]{1,0:T(1,128)}', space=vmem, size = 0x12000, scoped, tag = 'internal scratch']
  %s0 = inlined_call_operand.hbm [shape: f32[16,128], index: 0, kind: input, shape index: {}]
  %s1 = inlined_call_operand.hbm [shape: f32[16,128], index: 1, kind: input, shape index: {}]
  %s2 = inlined_call_operand.hbm [shape: f32[8,128], index: 2, kind: output, shape index: {}]
  %s3 = sld [smem:[#allocation0]]
  $region26: #{tpu_custom_call.1} parent=0
    _
  %s5 = ssub.s32 1, %s3
  %s6 = scalar_select 0, %s5, %s3
  $region1: #{tpu_custom_call.1} parent=0
    #allocation2 [shape = 'u8[8192]{0}', space=vmem, size = 0x2000, scoped, tag = 'input window, operand 0, single buffered']
    #allocation3 [shape = 's32[1]{0}', space=sflag, size = 0x4, scoped, tag = 'scoped memory for tpu_custom_call.1']
    #allocation4 [shape = 's32[1]{0}', space=sflag, size = 0x4, scoped, tag = 'scoped memory for tpu_custom_call.1']
    #allocation5 [shape = 'u8[8192]{0}', space=vmem, size = 0x2000, scoped, tag = 'input window, operand 1, single buffered']
    #allocation6 [shape = 's32[1]{0}', space=sflag, size = 0x4, scoped, tag = 'scoped memory for tpu_custom_call.1']
    #allocation7 [shape = 'u8[4096]{0}', space=vmem, size = 0x1000, scoped, tag = 'output window, operand 0, single buffered']
    %7 = vsyncpa [#allocation3], 0
    %8 = vsyncpa [#allocation6], 0
    %9 = vsyncpa [#allocation4], 0
    // Predicated region
    $region2: #{tpu_custom_call.1} parent=1 // pred_check
      _
    $region3: #{tpu_custom_call.1} parent=1 // pred_check_branch
      %11 = sbr.rel (0) target = $region5
    $region4: #{tpu_custom_call.1} parent=1 // pred_region
      %s13 = ssub.s32 256, 256
      %14 = vsyncadd [#allocation3], %s13
      %s15 = sshll.u32 [#allocation2], 4
      %s16 = int_to_ptr.vmem [resolvable:$true] %s15
      %21 = dma.hbm_to_vmem [thread:$0]  %s0, 256, %s16, [#allocation3], 128, 128, 8
    $region5: #{tpu_custom_call.1} parent=1 // pred_fallthru
      _
    // Predicated region
    $region6: #{tpu_custom_call.1} parent=1 // pred_check
      _
    $region7: #{tpu_custom_call.1} parent=1 // pred_check_branch
      %23 = sbr.rel (0) target = $region9
    $region8: #{tpu_custom_call.1} parent=1 // pred_region
      %s25 = ssub.s32 256, 256
      %26 = vsyncadd [#allocation6], %s25
      %s27 = sshll.u32 [#allocation5], 4
      %s28 = int_to_ptr.vmem [resolvable:$true] %s27
      %33 = dma.hbm_to_vmem [thread:$0]  %s1, 256, %s28, [#allocation6], 128, 128, 8
    $region9: #{tpu_custom_call.1} parent=1 // pred_fallthru
      _
    // Predicated region
    $region10: #{tpu_custom_call.1} parent=1 // pred_check
      _
    $region11: #{tpu_custom_call.1} parent=1 // pred_check_branch
      %35 = sbr.rel (0) target = $region13
    $region12: #{tpu_custom_call.1} parent=1 // pred_region
      %36 = dma.done [#allocation3], 256
    $region13: #{tpu_custom_call.1} parent=1 // pred_fallthru
      _
    // Predicated region
    $region14: #{tpu_custom_call.1} parent=1 // pred_check
      _
    $region15: #{tpu_custom_call.1} parent=1 // pred_check_branch
      %38 = sbr.rel (0) target = $region17
    $region16: #{tpu_custom_call.1} parent=1 // pred_region
      %39 = dma.done [#allocation6], 256
    $region17: #{tpu_custom_call.1} parent=1 // pred_fallthru
      _
    %v40 = vld [vmem:[#allocation2] sm:$0xff]
    %v41 = vld [vmem:[#allocation5] sm:$0xff]
    %v42 = vand.u32 2147483647, %v40
    %v43 = vsub.f32 0.0, %v42
    %v44 = vmul.f32 %v43, 1.442695
    %v45 = vpow.pop %v44
    %v46 = vmax.f32 %v40, 0.0
    %v47 = vmul.f32 %v40, %v41
    %v48 = vsub.f32 %v46, %v47
    %v49 = vadd.f32 %v45, 1.0
    %v50 = vlog2.pop %v49
    %v51 = vmul.f32 %v50, 0.6931472
    %v52 = vmul.f32 -0.5, %v45
    %v53 = vadd.f32 %v52, 1.0
    %v54 = vmul.f32 %v53, %v45
    %v55 = vand.u32 2147483647, %v45
    %vm56 = vcmp.lt.f32.partialorder %v55, 0.0004427343
    %v57 = vsel %vm56, %v54, %v51
    %v58 = vadd.f32 %v48, %v57
    %v59 = vadd.f32 %v45, 1.0
    %v60 = vrcp.pop %v59
    %vm61 = vcmp.ge.f32.partialorder %v40, 0.0
    %v62 = vmul.f32 %v45, %v60
    %v63 = vsel %vm61, %v60, %v62
    %v64 = vadd.f32 %v63, %v41
    %v65 = vmul.f32 %v63, 2.0
    %v66 = vmul.f32 %v65, %v41
    %v67 = vsub.f32 %v64, %v66
    %v68 = vmul.f32 %v41, -0.5
    %v69 = vadd.f32 %v68, 0.75
    %v70 = vrsqrt.pop %v67
    %v71 = vmul.f32 %v67, %v70
    %vm72 = vcmp.eq.f32.partialorder %v67, inf
    %v73 = vsel %vm72, %v67, %v71
    %vm74 = vcmp.eq.f32.partialorder %v67, 0.0
    %v75 = vand.u32 %v67, 2147483648
    %v76 = vsel %vm74, %v75, %v73
    %v77 = vmul.f32 %v67, %v76
    %v78 = vmul.f32 %v58, %v69
    %v79 = vmul.f32 %v78, %v77
    %v80 = vadd.f32 %v79, 0.0
    %s81 = scalar_lea.vmem [#allocation2], 8
    %v82 = vld [vmem:[%s81] sm:$0xff]
    %s83 = scalar_lea.vmem [#allocation5], 8
    %v84 = vld [vmem:[%s83] sm:$0xff]
    %v85 = vand.u32 2147483647, %v82
    %v86 = vsub.f32 0.0, %v85
    %v87 = vmul.f32 %v86, 1.442695
    %v88 = vpow.pop %v87
    %v89 = vmax.f32 %v82, 0.0
    %v90 = vmul.f32 %v82, %v84
    %v91 = vsub.f32 %v89, %v90
    %v92 = vadd.f32 %v88, 1.0
    %v93 = vlog2.pop %v92
    %v94 = vmul.f32 %v93, 0.6931472
    %v95 = vmul.f32 -0.5, %v88
    %v96 = vadd.f32 %v95, 1.0
    %v97 = vmul.f32 %v96, %v88
    %v98 = vand.u32 2147483647, %v88
    %vm99 = vcmp.lt.f32.partialorder %v98, 0.0004427343
    %v100 = vsel %vm99, %v97, %v94
    %v101 = vadd.f32 %v91, %v100
    %v102 = vadd.f32 %v88, 1.0
    %v103 = vrcp.pop %v102
    %vm104 = vcmp.ge.f32.partialorder %v82, 0.0
    %v105 = vmul.f32 %v88, %v103
    %v106 = vsel %vm104, %v103, %v105
    %v107 = vadd.f32 %v106, %v84
    %v108 = vmul.f32 %v106, 2.0
    %v109 = vmul.f32 %v108, %v84
    %v110 = vsub.f32 %v107, %v109
    %v111 = vmul.f32 %v84, -0.5
    %v112 = vadd.f32 %v111, 0.75
    %v113 = vrsqrt.pop %v110
    %v114 = vmul.f32 %v110, %v113
    %vm115 = vcmp.eq.f32.partialorder %v110, inf
    %v116 = vsel %vm115, %v110, %v114
    %vm117 = vcmp.eq.f32.partialorder %v110, 0.0
    %v118 = vand.u32 %v110, 2147483648
    %v119 = vsel %vm117, %v118, %v116
    %v120 = vmul.f32 %v110, %v119
    %v121 = vmul.f32 %v101, %v112
    %v122 = vmul.f32 %v121, %v120
    %v123 = vadd.f32 %v80, %v122
    %124 = vst [vmem:[#allocation7] sm:$0xff] %v123
    // Predicated region
    $region18: #{tpu_custom_call.1} parent=1 // pred_check
      _
    $region19: #{tpu_custom_call.1} parent=1 // pred_check_branch
      %126 = sbr.rel (0) target = $region21
    $region20: #{tpu_custom_call.1} parent=1 // pred_region
      %s128 = ssub.s32 128, 128
      %129 = vsyncadd [#allocation4], %s128
      %s131 = sshll.u32 [#allocation7], 4
      %s132 = int_to_ptr.vmem [resolvable:$true] %s131
      %134 = dma.vmem_to_hbm [thread:$0]  %s132, 128, %s2, [#allocation4]
    $region21: #{tpu_custom_call.1} parent=1 // pred_fallthru
      _
    // Predicated region
    $region22: #{tpu_custom_call.1} parent=1 // pred_check
      _
    $region23: #{tpu_custom_call.1} parent=1 // pred_check_branch
      %136 = sbr.rel (0) target = $region25
    $region24: #{tpu_custom_call.1} parent=1 // pred_region
      %137 = dma.done [#allocation4], 128
    $region25: #{tpu_custom_call.1} parent=1 // pred_fallthru
      _
    %138 = vsyncpa [#allocation3], 1
    %139 = vsyncpa [#allocation6], 1
    %140 = vsyncpa [#allocation4], 1

</llo_original>
